<compile_context>
chip_gen: v5e
topology: v5e:2x2
jax: 0.10.0
libtpu: 0.0.40
codegen_flags: <defaults>
</compile_context>

<pallas_src>
import functools

import jax
import jax.numpy as jnp
from jax.experimental import pallas as pl
from jax.experimental.pallas import tpu as pltpu
from jax.scipy.linalg import block_diag


PACK = 8            # logical rows packed per 128-lane register row (128 / in_features-friendly)
TILE_R_MAX = 4096   # packed rows per grid step  (= 32768 logical rows)


def _round_up(x, m):
    return ((x + m - 1) // m) * m


def _mlp_fused_kernel(*refs, n_layers, leaky_slope):
    """refs = (x_ref, w0, b0, w1, b1, ..., o_ref). One packed row-tile per call.

    x_ref : (tile_r, PACK*in_features)  -- 8 logical rows per register row.
    w_l   : (PACK*fan_in, PACK*fan_out) -- 8-way block-diagonal, resident in VMEM.
    b_l   : (1, PACK*fan_out)           -- bias tiled 8x along lanes.
    o_ref : (tile_r, PACK*out_features)
    """
    x_ref = refs[0]
    o_ref = refs[-1]
    wb_refs = refs[1:-1]

    h = x_ref[...]  # f32, lane-dense
    for layer in range(n_layers):
        w = wb_refs[2 * layer][...]
        b = wb_refs[2 * layer + 1][...]
        h = jnp.dot(h, w, preferred_element_type=jnp.float32) + b
        if layer != n_layers - 1:          # hidden activation: LeakyReLU(0.1)
            h = jnp.where(h >= 0.0, h, leaky_slope * h)
        # output activation is 'identity' -> nothing after the last linear
    o_ref[...] = h.astype(o_ref.dtype)


def mlp_forward(params, x, *, leaky_slope=0.1):
    """Matches MLP.forward: flatten leading dims, apply fused net, reshape back.

    params: list of (W, b) with W stored as (fan_in, fan_out) i.e. W^T of nn.Linear.
    x: (..., in_features) array.
    """
    head_shape = x.shape[:-1]
    in_features = x.shape[-1]
    out_features = params[-1][0].shape[1]
    n_layers = len(params)

    x2d = x.reshape(-1, in_features).astype(jnp.float32)
    n_rows = x2d.shape[0]

    # Pack PACK logical rows per register row. (N, K) row-major is byte-identical
    # to (N/PACK, PACK*K), so the reshape is a free bitcast. Only pad (<=7 rows)
    # when N is not a multiple of PACK.
    n_pad = _round_up(max(n_rows, 1), PACK)
    if n_pad != n_rows:
        x2d = jnp.pad(x2d, ((0, n_pad - n_rows), (0, 0)))
    r_rows = n_pad // PACK
    x_packed = x2d.reshape(r_rows, PACK * in_features)

    # Tile in packed-row space. Big tiles amortize the ~0.35us/step overhead;
    # cap so the grid has >= 2 steps when possible (both v7x TensorCores busy).
    if r_rows <= 8:
        tile_r = r_rows
    else:
        tile_r = min(TILE_R_MAX, _round_up(pl.cdiv(r_rows, 2), 8))
    grid = (pl.cdiv(r_rows, tile_r),)   # ragged last block handled by Pallas masking

    in_specs = [pl.BlockSpec((tile_r, PACK * in_features), lambda i: (i, 0))]
    args = [x_packed]
    flops = 0
    weight_bytes = 0
    for (w, b) in params:
        fan_in, fan_out = w.shape
        w_blk = block_diag(*([w.astype(jnp.float32)] * PACK))          # (P*fi, P*fo)
        b_blk = jnp.tile(b.reshape(1, fan_out).astype(jnp.float32), (1, PACK))
        # Full-array blocks with a constant index_map -> DMA'd once, stay resident.
        in_specs.append(pl.BlockSpec(w_blk.shape, lambda i: (0, 0)))
        in_specs.append(pl.BlockSpec(b_blk.shape, lambda i: (0, 0)))
        args.append(w_blk)
        args.append(b_blk)
        flops += 2 * n_rows * fan_in * fan_out
        weight_bytes += (w_blk.size + b_blk.size) * 4

    kernel = functools.partial(
        _mlp_fused_kernel, n_layers=n_layers, leaky_slope=leaky_slope
    )

    out_packed = pl.pallas_call(
        kernel,
        out_shape=jax.ShapeDtypeStruct((r_rows, PACK * out_features), jnp.float32),
        grid=grid,
        in_specs=in_specs,
        out_specs=pl.BlockSpec((tile_r, PACK * out_features), lambda i: (i, 0)),
        compiler_params=pltpu.CompilerParams(
            # Row tiles are independent -> shard across TensorCores (v7x).
            dimension_semantics=("parallel",),
            # Worst-case working set ~20 MiB at the max tile; 48 MiB leaves
            # headroom and stays below v7x's 64 MiB physical VMEM.
            vmem_limit_bytes=48 * 1024 * 1024,
        ),
        cost_estimate=pl.CostEstimate(
            flops=flops,
            transcendentals=0,
            bytes_accessed=n_pad * (in_features + out_features) * 4 + weight_bytes,
        ),
    )(*args)

    # (N/8, 8*out) row-major is byte-identical to (N, out): free reshape back.
    out = out_packed.reshape(n_pad, out_features)
    if n_pad != n_rows:
        out = out[:n_rows]
    return out.reshape(*head_shape, out_features)


def init_mlp_params(key, in_features, out_features, hidden_features, hidden_layers):
    """Deterministic synthetic params. Weight stored as (fan_in, fan_out) = W^T."""
    params = []
    dims = []
    if hidden_layers == 0:
        dims.append((in_features, out_features))
    else:
        for i in range(hidden_layers):
            dims.append((in_features if i == 0 else hidden_features, hidden_features))
        dims.append((hidden_features, out_features))
    for (fan_in, fan_out) in dims:
        key, kw, kb = jax.random.split(key, 3)
        bound = 1.0 / jnp.sqrt(fan_in)  # matches nn.Linear default init range
        w = jax.random.uniform(kw, (fan_in, fan_out), jnp.float32, -bound, bound)
        b = jax.random.uniform(kb, (fan_out,), jnp.float32, -bound, bound)
        params.append((w, b))
    return params


def _reference_mlp(params, x, leaky_slope=0.1):
    head_shape = x.shape[:-1]
    h = x.reshape(-1, x.shape[-1]).astype(jnp.float32)
    for i, (w, b) in enumerate(params):
        h = h @ w + b
        if i != len(params) - 1:
            h = jnp.where(h >= 0.0, h, leaky_slope * h)
    return h.reshape(*head_shape, params[-1][0].shape[1])


if __name__ == "__main__":
    in_features, hidden_features, hidden_layers, out_features = 16, 32, 2, 8

    key = jax.random.PRNGKey(0)
    key_x, key_p, key_x2, key_x3 = jax.random.split(key, 4)
    params = init_mlp_params(
        key_p, in_features, out_features, hidden_features, hidden_layers
    )

    # Primary small example consistent with the module: x last dim == in_features.
    x = jax.random.normal(key_x, (2, 8, in_features), jnp.float32)
    out = jax.block_until_ready(mlp_forward(params, x))
    assert out.shape == (2, 8, out_features), out.shape
    assert jnp.allclose(out, _reference_mlp(params, x), atol=1e-5, rtol=1e-5)

    # N not a multiple of the packing factor (exercises the tiny pad + slice path).
    x_odd = jax.random.normal(key_x2, (3, 5, in_features), jnp.float32)
    out_odd = jax.block_until_ready(mlp_forward(params, x_odd))
    assert out_odd.shape == (3, 5, out_features)
    assert jnp.allclose(out_odd, _reference_mlp(params, x_odd), atol=1e-5, rtol=1e-5)

    # Multi-step grid with a ragged last block (exercises bounds-masked blocks).
    x_big = jax.random.normal(key_x3, (4, 519, in_features), jnp.float32)
    out_big = jax.block_until_ready(mlp_forward(params, x_big))
    assert out_big.shape == (4, 519, out_features)
    assert jnp.allclose(out_big, _reference_mlp(params, x_big), atol=1e-5, rtol=1e-5)

    print("KERNEL_OK")
</pallas_src>

<mosaic_0001>
module attributes {stable_mosaic.version = 11 : i64} {
  func.func @_mlp_fused_kernel(%arg0: i32, %arg1: memref<2x128xf32, #tpu.memory_space<vmem>>, %arg2: memref<128x256xf32, #tpu.memory_space<vmem>>, %arg3: memref<1x256xf32, #tpu.memory_space<vmem>>, %arg4: memref<256x256xf32, #tpu.memory_space<vmem>>, %arg5: memref<1x256xf32, #tpu.memory_space<vmem>>, %arg6: memref<256x64xf32, #tpu.memory_space<vmem>>, %arg7: memref<1x64xf32, #tpu.memory_space<vmem>>, %arg8: memref<2x64xf32, #tpu.memory_space<vmem>>) attributes {dimension_semantics = [#tpu.dimension_semantics<parallel>], iteration_bounds = array<i64: 1>, scalar_prefetch = 0 : i64, scratch_operands = 0 : i64, tpu.core_type = #tpu.core_type<tc>, window_params = [{transform_indices = @transform_0, window_bounds = array<i64: 2, 128>}, {pipeline_mode = #tpu.pipeline_mode<synchronous>, transform_indices = @transform_1, window_bounds = array<i64: 128, 256>}, {pipeline_mode = #tpu.pipeline_mode<synchronous>, transform_indices = @transform_2, window_bounds = array<i64: 1, 256>}, {pipeline_mode = #tpu.pipeline_mode<synchronous>, transform_indices = @transform_3, window_bounds = array<i64: 256, 256>}, {pipeline_mode = #tpu.pipeline_mode<synchronous>, transform_indices = @transform_4, window_bounds = array<i64: 1, 256>}, {pipeline_mode = #tpu.pipeline_mode<synchronous>, transform_indices = @transform_5, window_bounds = array<i64: 256, 64>}, {pipeline_mode = #tpu.pipeline_mode<synchronous>, transform_indices = @transform_6, window_bounds = array<i64: 1, 64>}, {transform_indices = @transform_7, window_bounds = array<i64: 2, 64>}]} {
    %c0 = arith.constant 0 : index
    %c0_0 = arith.constant 0 : index
    %0 = vector.load %arg1[%c0, %c0_0] : memref<2x128xf32, #tpu.memory_space<vmem>>, vector<2x128xf32>
    %c0_1 = arith.constant 0 : index
    %c0_2 = arith.constant 0 : index
    %1 = vector.load %arg2[%c0_1, %c0_2] : memref<128x256xf32, #tpu.memory_space<vmem>>, vector<128x256xf32>
    %c0_3 = arith.constant 0 : index
    %c0_4 = arith.constant 0 : index
    %2 = vector.load %arg3[%c0_3, %c0_4] : memref<1x256xf32, #tpu.memory_space<vmem>>, vector<1x256xf32>
    %cst = arith.constant dense<0.000000e+00> : vector<2x256xf32>
    %3 = tpu.matmul %0, %1, %cst {dimension_numbers = #tpu.dot_dimension_numbers<[1], [0], [0], [1], [0, 0, 1, 1], [], []>} : vector<2x128xf32>, vector<128x256xf32>, vector<2x256xf32> -> vector<2x256xf32>
    %4 = vector.broadcast %2 : vector<1x256xf32> to vector<2x256xf32>
    %5 = arith.addf %3, %4 : vector<2x256xf32>
    %cst_5 = arith.constant 0.000000e+00 : f32
    %6 = vector.broadcast %cst_5 : f32 to vector<2x256xf32>
    %7 = arith.cmpf oge, %5, %6 : vector<2x256xf32>
    %cst_6 = arith.constant 1.000000e-01 : f32
    %8 = vector.broadcast %cst_6 : f32 to vector<2x256xf32>
    %9 = arith.mulf %8, %5 : vector<2x256xf32>
    %10 = arith.select %7, %5, %9 : vector<2x256xi1>, vector<2x256xf32>
    %c0_7 = arith.constant 0 : index
    %c0_8 = arith.constant 0 : index
    %11 = vector.load %arg4[%c0_7, %c0_8] : memref<256x256xf32, #tpu.memory_space<vmem>>, vector<256x256xf32>
    %c0_9 = arith.constant 0 : index
    %c0_10 = arith.constant 0 : index
    %12 = vector.load %arg5[%c0_9, %c0_10] : memref<1x256xf32, #tpu.memory_space<vmem>>, vector<1x256xf32>
    %cst_11 = arith.constant dense<0.000000e+00> : vector<2x256xf32>
    %13 = tpu.matmul %10, %11, %cst_11 {dimension_numbers = #tpu.dot_dimension_numbers<[1], [0], [0], [1], [0, 0, 1, 1], [], []>} : vector<2x256xf32>, vector<256x256xf32>, vector<2x256xf32> -> vector<2x256xf32>
    %14 = vector.broadcast %12 : vector<1x256xf32> to vector<2x256xf32>
    %15 = arith.addf %13, %14 : vector<2x256xf32>
    %cst_12 = arith.constant 0.000000e+00 : f32
    %16 = vector.broadcast %cst_12 : f32 to vector<2x256xf32>
    %17 = arith.cmpf oge, %15, %16 : vector<2x256xf32>
    %cst_13 = arith.constant 1.000000e-01 : f32
    %18 = vector.broadcast %cst_13 : f32 to vector<2x256xf32>
    %19 = arith.mulf %18, %15 : vector<2x256xf32>
    %20 = arith.select %17, %15, %19 : vector<2x256xi1>, vector<2x256xf32>
    %c0_14 = arith.constant 0 : index
    %c0_15 = arith.constant 0 : index
    %21 = vector.load %arg6[%c0_14, %c0_15] : memref<256x64xf32, #tpu.memory_space<vmem>>, vector<256x64xf32>
    %c0_16 = arith.constant 0 : index
    %c0_17 = arith.constant 0 : index
    %22 = vector.load %arg7[%c0_16, %c0_17] : memref<1x64xf32, #tpu.memory_space<vmem>>, vector<1x64xf32>
    %cst_18 = arith.constant dense<0.000000e+00> : vector<2x64xf32>
    %23 = tpu.matmul %20, %21, %cst_18 {dimension_numbers = #tpu.dot_dimension_numbers<[1], [0], [0], [1], [0, 0, 1, 1], [], []>} : vector<2x256xf32>, vector<256x64xf32>, vector<2x64xf32> -> vector<2x64xf32>
    %24 = vector.broadcast %22 : vector<1x64xf32> to vector<2x64xf32>
    %25 = arith.addf %23, %24 : vector<2x64xf32>
    %c0_19 = arith.constant 0 : index
    %c0_20 = arith.constant 0 : index
    %26 = vector.load %arg8[%c0_19, %c0_20] : memref<2x64xf32, #tpu.memory_space<vmem>>, vector<2x64xf32>
    tpu.vector_store %arg8[%c0_19, %c0_20], %25 {strides = array<i32>} : memref<2x64xf32, #tpu.memory_space<vmem>>, vector<2x64xf32>,
    return
  }
  func.func @transform_0(%arg0: i32) -> (i32, i32) {
    %c0_i32 = arith.constant 0 : i32
    %c0_i32_0 = arith.constant 0 : i32
    return %arg0, %c0_i32 : i32, i32
  }
  func.func @transform_1(%arg0: i32) -> (i32, i32) {
    %c0_i32 = arith.constant 0 : i32
    %c0_i32_0 = arith.constant 0 : i32
    %c0_i32_1 = arith.constant 0 : i32
    return %c0_i32, %c0_i32_0 : i32, i32
  }
  func.func @transform_2(%arg0: i32) -> (i32, i32) {
    %c0_i32 = arith.constant 0 : i32
    %c0_i32_0 = arith.constant 0 : i32
    %c0_i32_1 = arith.constant 0 : i32
    return %c0_i32, %c0_i32_0 : i32, i32
  }
  func.func @transform_3(%arg0: i32) -> (i32, i32) {
    %c0_i32 = arith.constant 0 : i32
    %c0_i32_0 = arith.constant 0 : i32
    %c0_i32_1 = arith.constant 0 : i32
    return %c0_i32, %c0_i32_0 : i32, i32
  }
  func.func @transform_4(%arg0: i32) -> (i32, i32) {
    %c0_i32 = arith.constant 0 : i32
    %c0_i32_0 = arith.constant 0 : i32
    %c0_i32_1 = arith.constant 0 : i32
    return %c0_i32, %c0_i32_0 : i32, i32
  }
  func.func @transform_5(%arg0: i32) -> (i32, i32) {
    %c0_i32 = arith.constant 0 : i32
    %c0_i32_0 = arith.constant 0 : i32
    %c0_i32_1 = arith.constant 0 : i32
    return %c0_i32, %c0_i32_0 : i32, i32
  }
  func.func @transform_6(%arg0: i32) -> (i32, i32) {
    %c0_i32 = arith.constant 0 : i32
    %c0_i32_0 = arith.constant 0 : i32
    %c0_i32_1 = arith.constant 0 : i32
    return %c0_i32, %c0_i32_0 : i32, i32
  }
  func.func @transform_7(%arg0: i32) -> (i32, i32) {
    %c0_i32 = arith.constant 0 : i32
    %c0_i32_0 = arith.constant 0 : i32
    return %arg0, %c0_i32 : i32, i32
  }
}

</mosaic_0001>

<llo_original>
// kernel: tpu_custom_call.1
$region0: #{tpu_custom_call.1}
  #allocation0 [shape = 'u32[]', space=smem, size = 0x4, offset = 0x4, fixed_abs, tag = 'smem constant byte address 0x4 - core index']
  #allocation1 [shape = 'u32[72,128]{1,0:T(1,128)}', space=vmem, size = 0x9000, scoped, tag = 'internal scratch']
  %s0 = inlined_call_operand.vmem [shape: f32[2,128], index: 0, kind: input, shape index: {}]
  %s1 = inlined_call_operand.vmem [shape: f32[128,256], index: 1, kind: input, shape index: {}]
  %s2 = inlined_call_operand.vmem [shape: f32[1,256], index: 2, kind: input, shape index: {}]
  %s3 = inlined_call_operand.hbm [shape: f32[256,256], index: 3, kind: input, shape index: {}]
  %s4 = inlined_call_operand.vmem [shape: f32[1,256], index: 4, kind: input, shape index: {}]
  %s5 = inlined_call_operand.vmem [shape: f32[256,64], index: 5, kind: input, shape index: {}]
  %s6 = inlined_call_operand.vmem [shape: f32[1,64], index: 6, kind: input, shape index: {}]
  %s7 = inlined_call_operand.hbm [shape: f32[2,64], index: 7, kind: output, shape index: {}]
  %s8 = sld [smem:[#allocation0]]
  $region42: #{tpu_custom_call.1} parent=0
    _
  %s10 = ssub.s32 1, %s8
  %s11 = scalar_select 0, %s10, %s8
  $region1: #{tpu_custom_call.1} parent=0
    #allocation2 [shape = 'u8[262144]{0}', space=vmem, size = 0x40000, scoped, tag = 'input window, operand 3, single buffered']
    #allocation3 [shape = 's32[1]{0}', space=sflag, size = 0x4, scoped, tag = 'scoped memory for tpu_custom_call.1']
    #allocation4 [shape = 's32[1]{0}', space=sflag, size = 0x4, scoped, tag = 'scoped memory for tpu_custom_call.1']
    #allocation5 [shape = 'u8[1024]{0}', space=vmem, size = 0x400, scoped, tag = 'output window, operand 0, single buffered']
    %12 = vsyncpa [#allocation3], 0
    %13 = vsyncpa [#allocation4], 0
    // Predicated region
    $region2: #{tpu_custom_call.1} parent=1 // pred_check
      _
    $region3: #{tpu_custom_call.1} parent=1 // pred_check_branch
      %15 = sbr.rel (0) target = $region5
    $region4: #{tpu_custom_call.1} parent=1 // pred_region
      _
    $region5: #{tpu_custom_call.1} parent=1 // pred_fallthru
      _
    // Predicated region
    $region6: #{tpu_custom_call.1} parent=1 // pred_check
      _
    $region7: #{tpu_custom_call.1} parent=1 // pred_check_branch
      %17 = sbr.rel (0) target = $region9
    $region8: #{tpu_custom_call.1} parent=1 // pred_region
      _
    $region9: #{tpu_custom_call.1} parent=1 // pred_fallthru
      _
    // Predicated region
    $region10: #{tpu_custom_call.1} parent=1 // pred_check
      _
    $region11: #{tpu_custom_call.1} parent=1 // pred_check_branch
      %19 = sbr.rel (0) target = $region13
    $region12: #{tpu_custom_call.1} parent=1 // pred_region
      _
    $region13: #{tpu_custom_call.1} parent=1 // pred_fallthru
      _
    // Predicated region
    $region14: #{tpu_custom_call.1} parent=1 // pred_check
      _
    $region15: #{tpu_custom_call.1} parent=1 // pred_check_branch
      %21 = sbr.rel (0) target = $region17
    $region16: #{tpu_custom_call.1} parent=1 // pred_region
      %23 = vsyncadd [#allocation3], 0
      %s24 = sshll.u32 %s3, 4
      %s25 = int_to_ptr.hbm [resolvable:$true] %s24
      %s26 = sshll.u32 [#allocation2], 4
      %s27 = int_to_ptr.vmem [resolvable:$true] %s26
      %32 = dma.hbm_to_vmem [thread:$0]  %s25, 8192, %s27, [#allocation3], 256, 256, 16
    $region17: #{tpu_custom_call.1} parent=1 // pred_fallthru
      _
    // Predicated region
    $region18: #{tpu_custom_call.1} parent=1 // pred_check
      _
    $region19: #{tpu_custom_call.1} parent=1 // pred_check_branch
      %34 = sbr.rel (0) target = $region21
    $region20: #{tpu_custom_call.1} parent=1 // pred_region
      _
    $region21: #{tpu_custom_call.1} parent=1 // pred_fallthru
      _
    // Predicated region
    $region22: #{tpu_custom_call.1} parent=1 // pred_check
      _
    $region23: #{tpu_custom_call.1} parent=1 // pred_check_branch
      %36 = sbr.rel (0) target = $region25
    $region24: #{tpu_custom_call.1} parent=1 // pred_region
      _
    $region25: #{tpu_custom_call.1} parent=1 // pred_fallthru
      _
    // Predicated region
    $region26: #{tpu_custom_call.1} parent=1 // pred_check
      _
    $region27: #{tpu_custom_call.1} parent=1 // pred_check_branch
      %38 = sbr.rel (0) target = $region29
    $region28: #{tpu_custom_call.1} parent=1 // pred_region
      _
    $region29: #{tpu_custom_call.1} parent=1 // pred_fallthru
      _
    // Predicated region
    $region30: #{tpu_custom_call.1} parent=1 // pred_check
      _
    $region31: #{tpu_custom_call.1} parent=1 // pred_check_branch
      %40 = sbr.rel (0) target = $region33
    $region32: #{tpu_custom_call.1} parent=1 // pred_region
      %42 = dma.done [#allocation3], 8192
    $region33: #{tpu_custom_call.1} parent=1 // pred_fallthru
      _
    %v43 = vld [vmem:[%s0] sm:$0x3]
    %v44 = vld [vmem:[%s1] sm:$0xff]
    %v45 = vld [vmem:[%s1 + $0x8] sm:$0xff]
    %v46 = vld [vmem:[%s1 + $0x10] sm:$0xff]
    %v47 = vld [vmem:[%s1 + $0x18] sm:$0xff]
    %v48 = vld [vmem:[%s1 + $0x20] sm:$0xff]
    %v49 = vld [vmem:[%s1 + $0x28] sm:$0xff]
    %v50 = vld [vmem:[%s1 + $0x30] sm:$0xff]
    %v51 = vld [vmem:[%s1 + $0x38] sm:$0xff]
    %v52 = vld [vmem:[%s1 + $0x40] sm:$0xff]
    %v53 = vld [vmem:[%s1 + $0x48] sm:$0xff]
    %v54 = vld [vmem:[%s1 + $0x50] sm:$0xff]
    %v55 = vld [vmem:[%s1 + $0x58] sm:$0xff]
    %v56 = vld [vmem:[%s1 + $0x60] sm:$0xff]
    %v57 = vld [vmem:[%s1 + $0x68] sm:$0xff]
    %v58 = vld [vmem:[%s1 + $0x70] sm:$0xff]
    %v59 = vld [vmem:[%s1 + $0x78] sm:$0xff]
    %v60 = vld [vmem:[%s1 + $0x80] sm:$0xff]
    %v61 = vld [vmem:[%s1 + $0x88] sm:$0xff]
    %v62 = vld [vmem:[%s1 + $0x90] sm:$0xff]
    %v63 = vld [vmem:[%s1 + $0x98] sm:$0xff]
    %v64 = vld [vmem:[%s1 + $0xa0] sm:$0xff]
    %v65 = vld [vmem:[%s1 + $0xa8] sm:$0xff]
    %v66 = vld [vmem:[%s1 + $0xb0] sm:$0xff]
    %v67 = vld [vmem:[%s1 + $0xb8] sm:$0xff]
    %v68 = vld [vmem:[%s1 + $0xc0] sm:$0xff]
    %v69 = vld [vmem:[%s1 + $0xc8] sm:$0xff]
    %v70 = vld [vmem:[%s1 + $0xd0] sm:$0xff]
    %v71 = vld [vmem:[%s1 + $0xd8] sm:$0xff]
    %v72 = vld [vmem:[%s1 + $0xe0] sm:$0xff]
    %v73 = vld [vmem:[%s1 + $0xe8] sm:$0xff]
    %v74 = vld [vmem:[%s1 + $0xf0] sm:$0xff]
    %v75 = vld [vmem:[%s1 + $0xf8] sm:$0xff]
    %v76 = vld [vmem:[%s2] sm:$0x3]
    %v78 = vperm.slane %v76, 0
    %v79 = vperm.slane %v76, 1
    %82 = vmatpush.msra.mxu0 %v74
    %83 = vmatpush.msra.mxu0 %v72
    %84 = vmatpush.msra.mxu0 %v70
    %85 = vmatpush.msra.mxu0 %v68
    %86 = vmatpush.msra.mxu0 %v66
    %87 = vmatpush.msra.mxu0 %v64
    %88 = vmatpush.msra.mxu0 %v62
    %89 = vmatpush.msra.mxu0 %v60
    %90 = vmatpush.msra.mxu0 %v58
    %91 = vmatpush.msra.mxu0 %v56
    %92 = vmatpush.msra.mxu0 %v54
    %93 = vmatpush.msra.mxu0 %v52
    %94 = vmatpush.msra.mxu0 %v50
    %95 = vmatpush.msra.mxu0 %v48
    %96 = vmatpush.msra.mxu0 %v46
    %97 = vmatpush.msra.mxu0 %v44
    %98 = vmatmul.f32.gmra.mxu0 %v43
    %v99 = vpop.f32.mrf.mxu0
    %v100 = vadd.f32 %v78, %v99
    %101 = vdwg.mxu0
    %102 = vmatpush.msra.mxu0 %v75
    %103 = vmatpush.msra.mxu0 %v73
    %104 = vmatpush.msra.mxu0 %v71
    %105 = vmatpush.msra.mxu0 %v69
    %106 = vmatpush.msra.mxu0 %v67
    %107 = vmatpush.msra.mxu0 %v65
    %108 = vmatpush.msra.mxu0 %v63
    %109 = vmatpush.msra.mxu0 %v61
    %110 = vmatpush.msra.mxu0 %v59
    %111 = vmatpush.msra.mxu0 %v57
    %112 = vmatpush.msra.mxu0 %v55
    %113 = vmatpush.msra.mxu0 %v53
    %114 = vmatpush.msra.mxu0 %v51
    %115 = vmatpush.msra.mxu0 %v49
    %116 = vmatpush.msra.mxu0 %v47
    %117 = vmatpush.msra.mxu0 %v45
    %118 = vmatmul.f32.gmra.mxu0 %v43
    %v119 = vpop.f32.mrf.mxu0
    %v120 = vadd.f32 %v79, %v119
    %121 = vdwg.mxu0
    %vm122 = vcmp.ge.f32.partialorder %v100, 0.0
    %vm123 = vcmp.ge.f32.partialorder %v120, 0.0
    %v124 = vmul.f32 %v100, 0.1
    %v125 = vmul.f32 %v120, 0.1
    %v126 = vsel %vm122, %v100, %v124
    %v127 = vsel %vm123, %v120, %v125
    %v128 = vld [vmem:[#allocation2] sm:$0xff]
    %v129 = vld [vmem:[#allocation2 + $0x8] sm:$0xff]
    %v130 = vld [vmem:[#allocation2 + $0x10] sm:$0xff]
    %v131 = vld [vmem:[#allocation2 + $0x18] sm:$0xff]
    %v132 = vld [vmem:[#allocation2 + $0x20] sm:$0xff]
    %v133 = vld [vmem:[#allocation2 + $0x28] sm:$0xff]
    %v134 = vld [vmem:[#allocation2 + $0x30] sm:$0xff]
    %v135 = vld [vmem:[#allocation2 + $0x38] sm:$0xff]
    %v136 = vld [vmem:[#allocation2 + $0x40] sm:$0xff]
    %v137 = vld [vmem:[#allocation2 + $0x48] sm:$0xff]
    %v138 = vld [vmem:[#allocation2 + $0x50] sm:$0xff]
    %v139 = vld [vmem:[#allocation2 + $0x58] sm:$0xff]
    %v140 = vld [vmem:[#allocation2 + $0x60] sm:$0xff]
    %v141 = vld [vmem:[#allocation2 + $0x68] sm:$0xff]
    %v142 = vld [vmem:[#allocation2 + $0x70] sm:$0xff]
    %v143 = vld [vmem:[#allocation2 + $0x78] sm:$0xff]
    %v144 = vld [vmem:[#allocation2 + $0x80] sm:$0xff]
    %v145 = vld [vmem:[#allocation2 + $0x88] sm:$0xff]
    %v146 = vld [vmem:[#allocation2 + $0x90] sm:$0xff]
    %v147 = vld [vmem:[#allocation2 + $0x98] sm:$0xff]
    %v148 = vld [vmem:[#allocation2 + $0xa0] sm:$0xff]
    %v149 = vld [vmem:[#allocation2 + $0xa8] sm:$0xff]
    %v150 = vld [vmem:[#allocation2 + $0xb0] sm:$0xff]
    %v151 = vld [vmem:[#allocation2 + $0xb8] sm:$0xff]
    %v152 = vld [vmem:[#allocation2 + $0xc0] sm:$0xff]
    %v153 = vld [vmem:[#allocation2 + $0xc8] sm:$0xff]
    %v154 = vld [vmem:[#allocation2 + $0xd0] sm:$0xff]
    %v155 = vld [vmem:[#allocation2 + $0xd8] sm:$0xff]
    %v156 = vld [vmem:[#allocation2 + $0xe0] sm:$0xff]
    %v157 = vld [vmem:[#allocation2 + $0xe8] sm:$0xff]
    %v158 = vld [vmem:[#allocation2 + $0xf0] sm:$0xff]
    %v159 = vld [vmem:[#allocation2 + $0xf8] sm:$0xff]
    %v160 = vld [vmem:[#allocation2 + $0x100] sm:$0xff]
    %v161 = vld [vmem:[#allocation2 + $0x108] sm:$0xff]
    %v162 = vld [vmem:[#allocation2 + $0x110] sm:$0xff]
    %v163 = vld [vmem:[#allocation2 + $0x118] sm:$0xff]
    %v164 = vld [vmem:[#allocation2 + $0x120] sm:$0xff]
    %v165 = vld [vmem:[#allocation2 + $0x128] sm:$0xff]
    %v166 = vld [vmem:[#allocation2 + $0x130] sm:$0xff]
    %v167 = vld [vmem:[#allocation2 + $0x138] sm:$0xff]
    %v168 = vld [vmem:[#allocation2 + $0x140] sm:$0xff]
    %v169 = vld [vmem:[#allocation2 + $0x148] sm:$0xff]
    %v170 = vld [vmem:[#allocation2 + $0x150] sm:$0xff]
    %v171 = vld [vmem:[#allocation2 + $0x158] sm:$0xff]
    %v172 = vld [vmem:[#allocation2 + $0x160] sm:$0xff]
    %v173 = vld [vmem:[#allocation2 + $0x168] sm:$0xff]
    %v174 = vld [vmem:[#allocation2 + $0x170] sm:$0xff]
    %v175 = vld [vmem:[#allocation2 + $0x178] sm:$0xff]
    %v176 = vld [vmem:[#allocation2 + $0x180] sm:$0xff]
    %v177 = vld [vmem:[#allocation2 + $0x188] sm:$0xff]
    %v178 = vld [vmem:[#allocation2 + $0x190] sm:$0xff]
    %v179 = vld [vmem:[#allocation2 + $0x198] sm:$0xff]
    %v180 = vld [vmem:[#allocation2 + $0x1a0] sm:$0xff]
    %v181 = vld [vmem:[#allocation2 + $0x1a8] sm:$0xff]
    %v182 = vld [vmem:[#allocation2 + $0x1b0] sm:$0xff]
    %v183 = vld [vmem:[#allocation2 + $0x1b8] sm:$0xff]
    %v184 = vld [vmem:[#allocation2 + $0x1c0] sm:$0xff]
    %v185 = vld [vmem:[#allocation2 + $0x1c8] sm:$0xff]
    %v186 = vld [vmem:[#allocation2 + $0x1d0] sm:$0xff]
    %v187 = vld [vmem:[#allocation2 + $0x1d8] sm:$0xff]
    %v188 = vld [vmem:[#allocation2 + $0x1e0] sm:$0xff]
    %v189 = vld [vmem:[#allocation2 + $0x1e8] sm:$0xff]
    %v190 = vld [vmem:[#allocation2 + $0x1f0] sm:$0xff]
    %v191 = vld [vmem:[#allocation2 + $0x1f8] sm:$0xff]
    %v192 = vld [vmem:[%s4] sm:$0x3]
    %v194 = vperm.slane %v192, 0
    %v195 = vperm.slane %v192, 1
    %198 = vmatpush.msra.mxu0 %v158
    %199 = vmatpush.msra.mxu0 %v156
    %200 = vmatpush.msra.mxu0 %v154
    %201 = vmatpush.msra.mxu0 %v152
    %202 = vmatpush.msra.mxu0 %v150
    %203 = vmatpush.msra.mxu0 %v148
    %204 = vmatpush.msra.mxu0 %v146
    %205 = vmatpush.msra.mxu0 %v144
    %206 = vmatpush.msra.mxu0 %v142
    %207 = vmatpush.msra.mxu0 %v140
    %208 = vmatpush.msra.mxu0 %v138
    %209 = vmatpush.msra.mxu0 %v136
    %210 = vmatpush.msra.mxu0 %v134
    %211 = vmatpush.msra.mxu0 %v132
    %212 = vmatpush.msra.mxu0 %v130
    %213 = vmatpush.msra.mxu0 %v128
    %214 = vmatmul.f32.gmra.mxu0 %v126
    %v215 = vpop.f32.mrf.mxu0
    %v216 = vadd.f32 %v194, %v215
    %217 = vdwg.mxu0
    %218 = vmatpush.msra.mxu0 %v190
    %219 = vmatpush.msra.mxu0 %v188
    %220 = vmatpush.msra.mxu0 %v186
    %221 = vmatpush.msra.mxu0 %v184
    %222 = vmatpush.msra.mxu0 %v182
    %223 = vmatpush.msra.mxu0 %v180
    %224 = vmatpush.msra.mxu0 %v178
    %225 = vmatpush.msra.mxu0 %v176
    %226 = vmatpush.msra.mxu0 %v174
    %227 = vmatpush.msra.mxu0 %v172
    %228 = vmatpush.msra.mxu0 %v170
    %229 = vmatpush.msra.mxu0 %v168
    %230 = vmatpush.msra.mxu0 %v166
    %231 = vmatpush.msra.mxu0 %v164
    %232 = vmatpush.msra.mxu0 %v162
    %233 = vmatpush.msra.mxu0 %v160
    %234 = vmatmul.f32.gmra.mxu0 %v127
    %v235 = vpop.f32.mrf.mxu0
    %v236 = vadd.f32 %v216, %v235
    %237 = vdwg.mxu0
    %238 = vmatpush.msra.mxu0 %v159
    %239 = vmatpush.msra.mxu0 %v157
    %240 = vmatpush.msra.mxu0 %v155
    %241 = vmatpush.msra.mxu0 %v153
    %242 = vmatpush.msra.mxu0 %v151
    %243 = vmatpush.msra.mxu0 %v149
    %244 = vmatpush.msra.mxu0 %v147
    %245 = vmatpush.msra.mxu0 %v145
    %246 = vmatpush.msra.mxu0 %v143
    %247 = vmatpush.msra.mxu0 %v141
    %248 = vmatpush.msra.mxu0 %v139
    %249 = vmatpush.msra.mxu0 %v137
    %250 = vmatpush.msra.mxu0 %v135
    %251 = vmatpush.msra.mxu0 %v133
    %252 = vmatpush.msra.mxu0 %v131
    %253 = vmatpush.msra.mxu0 %v129
    %254 = vmatmul.f32.gmra.mxu0 %v126
    %v255 = vpop.f32.mrf.mxu0
    %v256 = vadd.f32 %v195, %v255
    %257 = vdwg.mxu0
    %258 = vmatpush.msra.mxu0 %v191
    %259 = vmatpush.msra.mxu0 %v189
    %260 = vmatpush.msra.mxu0 %v187
    %261 = vmatpush.msra.mxu0 %v185
    %262 = vmatpush.msra.mxu0 %v183
    %263 = vmatpush.msra.mxu0 %v181
    %264 = vmatpush.msra.mxu0 %v179
    %265 = vmatpush.msra.mxu0 %v177
    %266 = vmatpush.msra.mxu0 %v175
    %267 = vmatpush.msra.mxu0 %v173
    %268 = vmatpush.msra.mxu0 %v171
    %269 = vmatpush.msra.mxu0 %v169
    %270 = vmatpush.msra.mxu0 %v167
    %271 = vmatpush.msra.mxu0 %v165
    %272 = vmatpush.msra.mxu0 %v163
    %273 = vmatpush.msra.mxu0 %v161
    %274 = vmatmul.f32.gmra.mxu0 %v127
    %v275 = vpop.f32.mrf.mxu0
    %v276 = vadd.f32 %v256, %v275
    %277 = vdwg.mxu0
    %vm278 = vcmp.ge.f32.partialorder %v236, 0.0
    %vm279 = vcmp.ge.f32.partialorder %v276, 0.0
    %v280 = vmul.f32 %v236, 0.1
    %v281 = vmul.f32 %v276, 0.1
    %v282 = vsel %vm278, %v236, %v280
    %v283 = vsel %vm279, %v276, %v281
    %v284 = vld [vmem:[%s5] sm:$0xff]
    %v285 = vld [vmem:[%s5 + $0x8] sm:$0xff]
    %v286 = vld [vmem:[%s5 + $0x10] sm:$0xff]
    %v287 = vld [vmem:[%s5 + $0x18] sm:$0xff]
    %v288 = vld [vmem:[%s5 + $0x20] sm:$0xff]
    %v289 = vld [vmem:[%s5 + $0x28] sm:$0xff]
    %v290 = vld [vmem:[%s5 + $0x30] sm:$0xff]
    %v291 = vld [vmem:[%s5 + $0x38] sm:$0xff]
    %v292 = vld [vmem:[%s5 + $0x40] sm:$0xff]
    %v293 = vld [vmem:[%s5 + $0x48] sm:$0xff]
    %v294 = vld [vmem:[%s5 + $0x50] sm:$0xff]
    %v295 = vld [vmem:[%s5 + $0x58] sm:$0xff]
    %v296 = vld [vmem:[%s5 + $0x60] sm:$0xff]
    %v297 = vld [vmem:[%s5 + $0x68] sm:$0xff]
    %v298 = vld [vmem:[%s5 + $0x70] sm:$0xff]
    %v299 = vld [vmem:[%s5 + $0x78] sm:$0xff]
    %v300 = vld [vmem:[%s5 + $0x80] sm:$0xff]
    %v301 = vld [vmem:[%s5 + $0x88] sm:$0xff]
    %v302 = vld [vmem:[%s5 + $0x90] sm:$0xff]
    %v303 = vld [vmem:[%s5 + $0x98] sm:$0xff]
    %v304 = vld [vmem:[%s5 + $0xa0] sm:$0xff]
    %v305 = vld [vmem:[%s5 + $0xa8] sm:$0xff]
    %v306 = vld [vmem:[%s5 + $0xb0] sm:$0xff]
    %v307 = vld [vmem:[%s5 + $0xb8] sm:$0xff]
    %v308 = vld [vmem:[%s5 + $0xc0] sm:$0xff]
    %v309 = vld [vmem:[%s5 + $0xc8] sm:$0xff]
    %v310 = vld [vmem:[%s5 + $0xd0] sm:$0xff]
    %v311 = vld [vmem:[%s5 + $0xd8] sm:$0xff]
    %v312 = vld [vmem:[%s5 + $0xe0] sm:$0xff]
    %v313 = vld [vmem:[%s5 + $0xe8] sm:$0xff]
    %v314 = vld [vmem:[%s5 + $0xf0] sm:$0xff]
    %v315 = vld [vmem:[%s5 + $0xf8] sm:$0xff]
    %v316 = vld [vmem:[%s6] sm:$0x1]
    %v318 = vperm.slane %v316, 0
    %320 = vmatpush.msra.mxu0 %v299
    %321 = vmatpush.msra.mxu0 %v298
    %322 = vmatpush.msra.mxu0 %v297
    %323 = vmatpush.msra.mxu0 %v296
    %324 = vmatpush.msra.mxu0 %v295
    %325 = vmatpush.msra.mxu0 %v294
    %326 = vmatpush.msra.mxu0 %v293
    %327 = vmatpush.msra.mxu0 %v292
    %328 = vmatpush.msra.mxu0 %v291
    %329 = vmatpush.msra.mxu0 %v290
    %330 = vmatpush.msra.mxu0 %v289
    %331 = vmatpush.msra.mxu0 %v288
    %332 = vmatpush.msra.mxu0 %v287
    %333 = vmatpush.msra.mxu0 %v286
    %334 = vmatpush.msra.mxu0 %v285
    %335 = vmatpush.msra.mxu0 %v284
    %336 = vmatmul.f32.gmra.mxu0 %v282
    %v337 = vpop.f32.mrf.mxu0
    %v338 = vadd.f32 %v318, %v337
    %339 = vdwg.mxu0
    %340 = vmatpush.msra.mxu0 %v315
    %341 = vmatpush.msra.mxu0 %v314
    %342 = vmatpush.msra.mxu0 %v313
    %343 = vmatpush.msra.mxu0 %v312
    %344 = vmatpush.msra.mxu0 %v311
    %345 = vmatpush.msra.mxu0 %v310
    %346 = vmatpush.msra.mxu0 %v309
    %347 = vmatpush.msra.mxu0 %v308
    %348 = vmatpush.msra.mxu0 %v307
    %349 = vmatpush.msra.mxu0 %v306
    %350 = vmatpush.msra.mxu0 %v305
    %351 = vmatpush.msra.mxu0 %v304
    %352 = vmatpush.msra.mxu0 %v303
    %353 = vmatpush.msra.mxu0 %v302
    %354 = vmatpush.msra.mxu0 %v301
    %355 = vmatpush.msra.mxu0 %v300
    %356 = vmatmul.f32.gmra.mxu0 %v283
    %v357 = vpop.f32.mrf.mxu0
    %v358 = vadd.f32 %v338, %v357
    %359 = vdwg.mxu0
    %vm360 = vcmask 517120
    %361 = vst.msk [vmem:[#allocation5] sm:$0x3] %vm360, %v358
    // Predicated region
    $region34: #{tpu_custom_call.1} parent=1 // pred_check
      _
    $region35: #{tpu_custom_call.1} parent=1 // pred_check_branch
      %363 = sbr.rel (0) target = $region37
    $region36: #{tpu_custom_call.1} parent=1 // pred_region
      %365 = vsyncadd [#allocation4], 0
      %s367 = sshll.u32 [#allocation5], 4
      %s368 = int_to_ptr.vmem [resolvable:$true] %s367
      %s369 = sshll.u32 %s7, 4
      %s370 = int_to_ptr.hbm [resolvable:$true] %s369
      %372 = dma.vmem_to_hbm [thread:$0]  %s368, 32, %s370, [#allocation4]
    $region37: #{tpu_custom_call.1} parent=1 // pred_fallthru
      _
    // Predicated region
    $region38: #{tpu_custom_call.1} parent=1 // pred_check
      _
    $region39: #{tpu_custom_call.1} parent=1 // pred_check_branch
      %374 = sbr.rel (0) target = $region41
    $region40: #{tpu_custom_call.1} parent=1 // pred_region
      %376 = dma.done [#allocation4], 32
    $region41: #{tpu_custom_call.1} parent=1 // pred_fallthru
      _
    %377 = vsyncpa [#allocation3], 1
    %378 = vsyncpa [#allocation4], 1

</llo_original>
